<compile_context>
chip_gen: v5e
topology: v5e:2x2
jax: 0.10.0
libtpu: 0.0.40
codegen_flags: <defaults>
</compile_context>

<pallas_src>
import functools

import jax
import jax.numpy as jnp
from jax.experimental import pallas as pl
from jax.experimental.pallas import tpu as pltpu

IN_DIM = 500      # fixed by the module: nn.Linear(500, h)
OUT_DIM = 2       # nn.Linear(h, 2)
HIDDEN = 256      # constructor arg h (small for this synthetic test)
SLOPE = 0.2       # args.slope

MAX_BATCH_TILE = 1024   # ~4 MiB double-buffered f32 x tile; amortizes the
                        # ~0.35 us per-grid-step overhead on v5e/v6e


def _leaky_relu(x, slope):
    return jnp.where(x >= 0, x, slope * x)


def _round_up(x, m):
    return ((x + m - 1) // m) * m


def discriminator_kernel(x_ref, w1_ref, b1_ref, w2_ref, b2_ref, w3_ref, b3_ref,
                         o_ref, *, slope):
    # Cast x to bf16 in-kernel (VPU is idle).  The contraction runs at K=500
    # directly; Mosaic masks the K tail and the MXU is nowhere near the
    # bottleneck, so the unaligned K costs nothing that matters.
    x = x_ref[...].astype(jnp.bfloat16)
    # Layer 1: (tb, 500)bf16 @ (500, H)bf16 -> f32 acc, bias + leaky_relu in f32
    h1 = jnp.dot(x, w1_ref[...], preferred_element_type=jnp.float32) + b1_ref[...]
    h1 = _leaky_relu(h1, slope).astype(jnp.bfloat16)
    # Layer 2: (tb, H)bf16 @ (H, H)bf16 -> f32 acc
    h2 = jnp.dot(h1, w2_ref[...], preferred_element_type=jnp.float32) + b2_ref[...]
    h2 = _leaky_relu(h2, slope).astype(jnp.bfloat16)
    # Layer 3: (tb, H)bf16 @ (H, 2)bf16 -> (tb, 2) f32; only real columns stored.
    o_ref[...] = (jnp.dot(h2, w3_ref[...], preferred_element_type=jnp.float32)
                  + b3_ref[...]).astype(o_ref.dtype)


def _choose_batch_tile(B):
    if B <= 256:
        return _round_up(B, 8)                 # tiny batch: single step
    # mid/large batches: >= 2 grid steps (v7x megacore / DMA pipelining),
    # capped tile so per-step VMEM stays small and step overhead amortizes.
    return min(MAX_BATCH_TILE, _round_up(pl.cdiv(B, 2), 8))


def prepare_params(params):
    """One-time dtype prep (hoisted out of the per-call path): weights become
    bf16 MXU operands, biases stay f32 (added to the f32 accumulator)."""
    return dict(
        w1=params["w1"].astype(jnp.bfloat16),   # (500, H)
        w2=params["w2"].astype(jnp.bfloat16),   # (H, H)
        w3=params["w3"].astype(jnp.bfloat16),   # (H, 2)
        b1=params["b1"].astype(jnp.float32),    # (1, H)
        b2=params["b2"].astype(jnp.float32),    # (1, H)
        b3=params["b3"].astype(jnp.float32),    # (1, 2)
    )


def discriminator_forward(x, prepared, *, slope=SLOPE, batch_tile=None):
    """x: (B, 500) float32. prepared: output of prepare_params()."""
    B, D = x.shape
    assert D == IN_DIM
    w1, b1 = prepared["w1"], prepared["b1"]
    w2, b2 = prepared["w2"], prepared["b2"]
    w3, b3 = prepared["w3"], prepared["b3"]
    H = w1.shape[1]

    # --- batch tiling: pad B up to a tile multiple only if needed; rows are
    # independent so pad rows are simply sliced off afterwards. ---
    tb = batch_tile if batch_tile is not None else _choose_batch_tile(B)
    B_pad = _round_up(B, tb)
    x_in = x if B_pad == B else jnp.pad(x, ((0, B_pad - B), (0, 0)))
    grid = (B_pad // tb,)

    flops = 2 * B_pad * (IN_DIM * H + H * H + H * OUT_DIM)
    bytes_accessed = (x_in.size * 4
                      + (w1.size + w2.size + w3.size) * 2
                      + (b1.size + b2.size + b3.size) * 4
                      + B_pad * OUT_DIM * 4)

    kernel = functools.partial(discriminator_kernel, slope=slope)

    out = pl.pallas_call(
        kernel,
        out_shape=jax.ShapeDtypeStruct((B_pad, OUT_DIM), jnp.float32),
        grid=grid,
        in_specs=[
            pl.BlockSpec((tb, IN_DIM), lambda i: (i, 0)),    # x tile (streamed, f32)
            pl.BlockSpec((IN_DIM, H), lambda i: (0, 0)),     # w1 (resident)
            pl.BlockSpec((1, H), lambda i: (0, 0)),          # b1
            pl.BlockSpec((H, H), lambda i: (0, 0)),          # w2
            pl.BlockSpec((1, H), lambda i: (0, 0)),          # b2
            pl.BlockSpec((H, OUT_DIM), lambda i: (0, 0)),    # w3
            pl.BlockSpec((1, OUT_DIM), lambda i: (0, 0)),    # b3
        ],
        out_specs=pl.BlockSpec((tb, OUT_DIM), lambda i: (i, 0)),
        compiler_params=pltpu.CompilerParams(
            dimension_semantics=("parallel",)),
        cost_estimate=pl.CostEstimate(
            flops=flops, transcendentals=0, bytes_accessed=bytes_accessed),
    )(x_in, w1, b1, w2, b2, w3, b3)

    return out if B_pad == B else out[:B]


def init_params(key, h=HIDDEN):
    """Deterministic Kaiming-normal-ish init (fan_in), matching module shapes."""
    k1, k2, k3, k4, k5, k6 = jax.random.split(key, 6)

    def kaiming(k, fan_in, shape):
        return (jax.random.normal(k, shape, jnp.float32)
                * jnp.sqrt(2.0 / fan_in))

    # Stored as (in, out): transpose of PyTorch's (out, in) layout.
    w1 = kaiming(k1, IN_DIM, (IN_DIM, h))
    w2 = kaiming(k2, h, (h, h))
    w3 = kaiming(k3, h, (h, OUT_DIM))
    # PyTorch default bias init: U(-1/sqrt(fan_in), 1/sqrt(fan_in))
    b1 = jax.random.uniform(k4, (1, h), jnp.float32,
                            -1.0 / jnp.sqrt(IN_DIM), 1.0 / jnp.sqrt(IN_DIM))
    b2 = jax.random.uniform(k5, (1, h), jnp.float32,
                            -1.0 / jnp.sqrt(h), 1.0 / jnp.sqrt(h))
    b3 = jax.random.uniform(k6, (1, OUT_DIM), jnp.float32,
                            -1.0 / jnp.sqrt(h), 1.0 / jnp.sqrt(h))
    return dict(w1=w1, b1=b1, w2=w2, b2=b2, w3=w3, b3=b3)


def reference_forward(x, params, slope=SLOPE):
    h1 = _leaky_relu(x @ params["w1"] + params["b1"], slope)
    h2 = _leaky_relu(h1 @ params["w2"] + params["b2"], slope)
    return h2 @ params["w3"] + params["b3"]


if __name__ == "__main__":
    key = jax.random.PRNGKey(0)
    kx, kp = jax.random.split(key)

    B = 8
    x = jax.random.normal(kx, (B, IN_DIM), jnp.float32)
    params = init_params(kp, HIDDEN)
    prepared = prepare_params(params)   # once, outside the per-call path

    out = discriminator_forward(x, prepared, slope=SLOPE)
    out = jax.block_until_ready(out)

    ref = reference_forward(x, params, SLOPE)
    assert out.shape == (B, OUT_DIM), out.shape
    # bf16 matmul inputs with f32 accumulation: compare with a relative check.
    rel_err = float(jnp.max(jnp.abs(out - ref)) /
                    (jnp.max(jnp.abs(ref)) + 1e-6))
    assert rel_err < 5e-2, rel_err

    print("KERNEL_OK")
</pallas_src>

<mosaic_0001>
module attributes {stable_mosaic.version = 11 : i64} {
  func.func @discriminator_kernel(%arg0: i32, %arg1: memref<8x500xf32, #tpu.memory_space<vmem>>, %arg2: memref<500x256xbf16, #tpu.memory_space<vmem>>, %arg3: memref<1x256xf32, #tpu.memory_space<vmem>>, %arg4: memref<256x256xbf16, #tpu.memory_space<vmem>>, %arg5: memref<1x256xf32, #tpu.memory_space<vmem>>, %arg6: memref<256x2xbf16, #tpu.memory_space<vmem>>, %arg7: memref<1x2xf32, #tpu.memory_space<vmem>>, %arg8: memref<8x2xf32, #tpu.memory_space<vmem>>) attributes {dimension_semantics = [#tpu.dimension_semantics<parallel>], iteration_bounds = array<i64: 1>, scalar_prefetch = 0 : i64, scratch_operands = 0 : i64, tpu.core_type = #tpu.core_type<tc>, window_params = [{transform_indices = @transform_0, window_bounds = array<i64: 8, 500>}, {pipeline_mode = #tpu.pipeline_mode<synchronous>, transform_indices = @transform_1, window_bounds = array<i64: 500, 256>}, {pipeline_mode = #tpu.pipeline_mode<synchronous>, transform_indices = @transform_2, window_bounds = array<i64: 1, 256>}, {pipeline_mode = #tpu.pipeline_mode<synchronous>, transform_indices = @transform_3, window_bounds = array<i64: 256, 256>}, {pipeline_mode = #tpu.pipeline_mode<synchronous>, transform_indices = @transform_4, window_bounds = array<i64: 1, 256>}, {pipeline_mode = #tpu.pipeline_mode<synchronous>, transform_indices = @transform_5, window_bounds = array<i64: 256, 2>}, {pipeline_mode = #tpu.pipeline_mode<synchronous>, transform_indices = @transform_6, window_bounds = array<i64: 1, 2>}, {transform_indices = @transform_7, window_bounds = array<i64: 8, 2>}]} {
    %c0 = arith.constant 0 : index
    %c0_0 = arith.constant 0 : index
    %0 = vector.load %arg1[%c0, %c0_0] : memref<8x500xf32, #tpu.memory_space<vmem>>, vector<8x500xf32>
    %1 = arith.truncf %0 : vector<8x500xf32> to vector<8x500xbf16>
    %c0_1 = arith.constant 0 : index
    %c0_2 = arith.constant 0 : index
    %2 = vector.load %arg2[%c0_1, %c0_2] : memref<500x256xbf16, #tpu.memory_space<vmem>>, vector<500x256xbf16>
    %cst = arith.constant dense<0.000000e+00> : vector<8x256xf32>
    %3 = tpu.matmul %1, %2, %cst {dimension_numbers = #tpu.dot_dimension_numbers<[1], [0], [0], [1], [0, 0, 1, 1], [], []>} : vector<8x500xbf16>, vector<500x256xbf16>, vector<8x256xf32> -> vector<8x256xf32>
    %c0_3 = arith.constant 0 : index
    %c0_4 = arith.constant 0 : index
    %4 = vector.load %arg3[%c0_3, %c0_4] : memref<1x256xf32, #tpu.memory_space<vmem>>, vector<1x256xf32>
    %5 = vector.broadcast %4 : vector<1x256xf32> to vector<8x256xf32>
    %6 = arith.addf %3, %5 : vector<8x256xf32>
    %cst_5 = arith.constant 0.000000e+00 : f32
    %7 = vector.broadcast %cst_5 : f32 to vector<8x256xf32>
    %8 = arith.cmpf oge, %6, %7 : vector<8x256xf32>
    %cst_6 = arith.constant 2.000000e-01 : f32
    %9 = vector.broadcast %cst_6 : f32 to vector<8x256xf32>
    %10 = arith.mulf %9, %6 : vector<8x256xf32>
    %11 = arith.select %8, %6, %10 : vector<8x256xi1>, vector<8x256xf32>
    %12 = arith.truncf %11 : vector<8x256xf32> to vector<8x256xbf16>
    %c0_7 = arith.constant 0 : index
    %c0_8 = arith.constant 0 : index
    %13 = vector.load %arg4[%c0_7, %c0_8] : memref<256x256xbf16, #tpu.memory_space<vmem>>, vector<256x256xbf16>
    %cst_9 = arith.constant dense<0.000000e+00> : vector<8x256xf32>
    %14 = tpu.matmul %12, %13, %cst_9 {dimension_numbers = #tpu.dot_dimension_numbers<[1], [0], [0], [1], [0, 0, 1, 1], [], []>} : vector<8x256xbf16>, vector<256x256xbf16>, vector<8x256xf32> -> vector<8x256xf32>
    %c0_10 = arith.constant 0 : index
    %c0_11 = arith.constant 0 : index
    %15 = vector.load %arg5[%c0_10, %c0_11] : memref<1x256xf32, #tpu.memory_space<vmem>>, vector<1x256xf32>
    %16 = vector.broadcast %15 : vector<1x256xf32> to vector<8x256xf32>
    %17 = arith.addf %14, %16 : vector<8x256xf32>
    %cst_12 = arith.constant 0.000000e+00 : f32
    %18 = vector.broadcast %cst_12 : f32 to vector<8x256xf32>
    %19 = arith.cmpf oge, %17, %18 : vector<8x256xf32>
    %cst_13 = arith.constant 2.000000e-01 : f32
    %20 = vector.broadcast %cst_13 : f32 to vector<8x256xf32>
    %21 = arith.mulf %20, %17 : vector<8x256xf32>
    %22 = arith.select %19, %17, %21 : vector<8x256xi1>, vector<8x256xf32>
    %23 = arith.truncf %22 : vector<8x256xf32> to vector<8x256xbf16>
    %c0_14 = arith.constant 0 : index
    %c0_15 = arith.constant 0 : index
    %24 = vector.load %arg6[%c0_14, %c0_15] : memref<256x2xbf16, #tpu.memory_space<vmem>>, vector<256x2xbf16>
    %cst_16 = arith.constant dense<0.000000e+00> : vector<8x2xf32>
    %25 = tpu.matmul %23, %24, %cst_16 {dimension_numbers = #tpu.dot_dimension_numbers<[1], [0], [0], [1], [0, 0, 1, 1], [], []>} : vector<8x256xbf16>, vector<256x2xbf16>, vector<8x2xf32> -> vector<8x2xf32>
    %c0_17 = arith.constant 0 : index
    %c0_18 = arith.constant 0 : index
    %26 = vector.load %arg7[%c0_17, %c0_18] : memref<1x2xf32, #tpu.memory_space<vmem>>, vector<1x2xf32>
    %27 = vector.broadcast %26 : vector<1x2xf32> to vector<8x2xf32>
    %28 = arith.addf %25, %27 : vector<8x2xf32>
    %c0_19 = arith.constant 0 : index
    %c0_20 = arith.constant 0 : index
    %29 = vector.load %arg8[%c0_19, %c0_20] : memref<8x2xf32, #tpu.memory_space<vmem>>, vector<8x2xf32>
    tpu.vector_store %arg8[%c0_19, %c0_20], %28 {strides = array<i32>} : memref<8x2xf32, #tpu.memory_space<vmem>>, vector<8x2xf32>,
    return
  }
  func.func @transform_0(%arg0: i32) -> (i32, i32) {
    %c0_i32 = arith.constant 0 : i32
    %c0_i32_0 = arith.constant 0 : i32
    return %arg0, %c0_i32 : i32, i32
  }
  func.func @transform_1(%arg0: i32) -> (i32, i32) {
    %c0_i32 = arith.constant 0 : i32
    %c0_i32_0 = arith.constant 0 : i32
    %c0_i32_1 = arith.constant 0 : i32
    return %c0_i32, %c0_i32_0 : i32, i32
  }
  func.func @transform_2(%arg0: i32) -> (i32, i32) {
    %c0_i32 = arith.constant 0 : i32
    %c0_i32_0 = arith.constant 0 : i32
    %c0_i32_1 = arith.constant 0 : i32
    return %c0_i32, %c0_i32_0 : i32, i32
  }
  func.func @transform_3(%arg0: i32) -> (i32, i32) {
    %c0_i32 = arith.constant 0 : i32
    %c0_i32_0 = arith.constant 0 : i32
    %c0_i32_1 = arith.constant 0 : i32
    return %c0_i32, %c0_i32_0 : i32, i32
  }
  func.func @transform_4(%arg0: i32) -> (i32, i32) {
    %c0_i32 = arith.constant 0 : i32
    %c0_i32_0 = arith.constant 0 : i32
    %c0_i32_1 = arith.constant 0 : i32
    return %c0_i32, %c0_i32_0 : i32, i32
  }
  func.func @transform_5(%arg0: i32) -> (i32, i32) {
    %c0_i32 = arith.constant 0 : i32
    %c0_i32_0 = arith.constant 0 : i32
    %c0_i32_1 = arith.constant 0 : i32
    return %c0_i32, %c0_i32_0 : i32, i32
  }
  func.func @transform_6(%arg0: i32) -> (i32, i32) {
    %c0_i32 = arith.constant 0 : i32
    %c0_i32_0 = arith.constant 0 : i32
    %c0_i32_1 = arith.constant 0 : i32
    return %c0_i32, %c0_i32_0 : i32, i32
  }
  func.func @transform_7(%arg0: i32) -> (i32, i32) {
    %c0_i32 = arith.constant 0 : i32
    %c0_i32_0 = arith.constant 0 : i32
    return %arg0, %c0_i32 : i32, i32
  }
}

</mosaic_0001>

<llo_original>
// kernel: tpu_custom_call.1
$region0: #{tpu_custom_call.1}
  #allocation0 [shape = 'u32[]', space=smem, size = 0x4, offset = 0x4, fixed_abs, tag = 'smem constant byte address 0x4 - core index']
  #allocation1 [shape = 'u32[72,128]{1,0:T(1,128)}', space=vmem, size = 0x9000, scoped, tag = 'internal scratch']
  %s0 = inlined_call_operand.vmem [shape: f32[8,500], index: 0, kind: input, shape index: {}]
  %s1 = inlined_call_operand.hbm [shape: bf16[500,256], index: 1, kind: input, shape index: {}]
  %s2 = inlined_call_operand.vmem [shape: f32[1,256], index: 2, kind: input, shape index: {}]
  %s3 = inlined_call_operand.hbm [shape: bf16[256,256], index: 3, kind: input, shape index: {}]
  %s4 = inlined_call_operand.vmem [shape: f32[1,256], index: 4, kind: input, shape index: {}]
  %s5 = inlined_call_operand.vmem [shape: bf16[256,2], index: 5, kind: input, shape index: {}]
  %s6 = inlined_call_operand.vmem [shape: f32[1,2], index: 6, kind: input, shape index: {}]
  %s7 = inlined_call_operand.vmem [shape: f32[8,2], index: 7, kind: output, shape index: {}]
  %s8 = sld [smem:[#allocation0]]
  $region46: #{tpu_custom_call.1} parent=0
    _
  %s10 = ssub.s32 1, %s8
  %s11 = scalar_select 0, %s10, %s8
  $region1: #{tpu_custom_call.1} parent=0
    #allocation2 [shape = 'u8[258048]{0}', space=vmem, size = 0x3f000, scoped, tag = 'input window, operand 1, single buffered']
    #allocation3 [shape = 's32[1]{0}', space=sflag, size = 0x4, scoped, tag = 'scoped memory for tpu_custom_call.1']
    #allocation4 [shape = 'u8[131072]{0}', space=vmem, size = 0x20000, scoped, tag = 'input window, operand 3, single buffered']
    #allocation5 [shape = 's32[1]{0}', space=sflag, size = 0x4, scoped, tag = 'scoped memory for tpu_custom_call.1']
    %12 = vsyncpa [#allocation3], 0
    %13 = vsyncpa [#allocation5], 0
    // Predicated region
    $region2: #{tpu_custom_call.1} parent=1 // pred_check
      _
    $region3: #{tpu_custom_call.1} parent=1 // pred_check_branch
      %15 = sbr.rel (0) target = $region5
    $region4: #{tpu_custom_call.1} parent=1 // pred_region
      _
    $region5: #{tpu_custom_call.1} parent=1 // pred_fallthru
      _
    // Predicated region
    $region6: #{tpu_custom_call.1} parent=1 // pred_check
      _
    $region7: #{tpu_custom_call.1} parent=1 // pred_check_branch
      %17 = sbr.rel (0) target = $region9
    $region8: #{tpu_custom_call.1} parent=1 // pred_region
      %19 = vsyncadd [#allocation3], 0
      %s20 = sshll.u32 %s1, 4
      %s21 = int_to_ptr.hbm [resolvable:$true] %s20
      %s22 = sshll.u32 [#allocation2], 4
      %s23 = int_to_ptr.vmem [resolvable:$true] %s22
      %28 = dma.hbm_to_vmem [thread:$0]  %s21, 8064, %s23, [#allocation3], 128, 128, 8
    $region9: #{tpu_custom_call.1} parent=1 // pred_fallthru
      _
    // Predicated region
    $region10: #{tpu_custom_call.1} parent=1 // pred_check
      _
    $region11: #{tpu_custom_call.1} parent=1 // pred_check_branch
      %30 = sbr.rel (0) target = $region13
    $region12: #{tpu_custom_call.1} parent=1 // pred_region
      _
    $region13: #{tpu_custom_call.1} parent=1 // pred_fallthru
      _
    // Predicated region
    $region14: #{tpu_custom_call.1} parent=1 // pred_check
      _
    $region15: #{tpu_custom_call.1} parent=1 // pred_check_branch
      %32 = sbr.rel (0) target = $region17
    $region16: #{tpu_custom_call.1} parent=1 // pred_region
      %34 = vsyncadd [#allocation5], 0
      %s35 = sshll.u32 %s3, 4
      %s36 = int_to_ptr.hbm [resolvable:$true] %s35
      %s37 = sshll.u32 [#allocation4], 4
      %s38 = int_to_ptr.vmem [resolvable:$true] %s37
      %43 = dma.hbm_to_vmem [thread:$0]  %s36, 4096, %s38, [#allocation5], 128, 128, 8
    $region17: #{tpu_custom_call.1} parent=1 // pred_fallthru
      _
    // Predicated region
    $region18: #{tpu_custom_call.1} parent=1 // pred_check
      _
    $region19: #{tpu_custom_call.1} parent=1 // pred_check_branch
      %45 = sbr.rel (0) target = $region21
    $region20: #{tpu_custom_call.1} parent=1 // pred_region
      _
    $region21: #{tpu_custom_call.1} parent=1 // pred_fallthru
      _
    // Predicated region
    $region22: #{tpu_custom_call.1} parent=1 // pred_check
      _
    $region23: #{tpu_custom_call.1} parent=1 // pred_check_branch
      %47 = sbr.rel (0) target = $region25
    $region24: #{tpu_custom_call.1} parent=1 // pred_region
      _
    $region25: #{tpu_custom_call.1} parent=1 // pred_fallthru
      _
    // Predicated region
    $region26: #{tpu_custom_call.1} parent=1 // pred_check
      _
    $region27: #{tpu_custom_call.1} parent=1 // pred_check_branch
      %49 = sbr.rel (0) target = $region29
    $region28: #{tpu_custom_call.1} parent=1 // pred_region
      _
    $region29: #{tpu_custom_call.1} parent=1 // pred_fallthru
      _
    // Predicated region
    $region30: #{tpu_custom_call.1} parent=1 // pred_check
      _
    $region31: #{tpu_custom_call.1} parent=1 // pred_check_branch
      %51 = sbr.rel (0) target = $region33
    $region32: #{tpu_custom_call.1} parent=1 // pred_region
      %53 = dma.done [#allocation3], 8064
    $region33: #{tpu_custom_call.1} parent=1 // pred_fallthru
      _
    // Predicated region
    $region34: #{tpu_custom_call.1} parent=1 // pred_check
      _
    $region35: #{tpu_custom_call.1} parent=1 // pred_check_branch
      %55 = sbr.rel (0) target = $region37
    $region36: #{tpu_custom_call.1} parent=1 // pred_region
      %57 = dma.done [#allocation5], 4096
    $region37: #{tpu_custom_call.1} parent=1 // pred_fallthru
      _
    %v58 = vld [vmem:[%s0] sm:$0xff]
    %v59 = vld [vmem:[%s0 + $0x8] sm:$0xff]
    %v60 = vld [vmem:[%s0 + $0x10] sm:$0xff]
    %v61 = vld [vmem:[%s0 + $0x18] sm:$0xff]
    %v62 = vpack.c.bf16 %v58, %v58
    %v63 = vpack.c.bf16 %v59, %v59
    %v64 = vpack.c.bf16 %v60, %v60
    %v65 = vpack.c.bf16 %v61, %v61
    %v66 = vld [vmem:[#allocation2] sm:$0xff]
    %v67 = vld [vmem:[#allocation2 + $0x8] sm:$0xff]
    %v68 = vld [vmem:[#allocation2 + $0x10] sm:$0xff]
    %v69 = vld [vmem:[#allocation2 + $0x18] sm:$0xff]
    %v70 = vld [vmem:[#allocation2 + $0x20] sm:$0xff]
    %v71 = vld [vmem:[#allocation2 + $0x28] sm:$0xff]
    %v72 = vld [vmem:[#allocation2 + $0x30] sm:$0xff]
    %v73 = vld [vmem:[#allocation2 + $0x38] sm:$0xff]
    %v74 = vld [vmem:[#allocation2 + $0x40] sm:$0xff]
    %v75 = vld [vmem:[#allocation2 + $0x48] sm:$0xff]
    %v76 = vld [vmem:[#allocation2 + $0x50] sm:$0xff]
    %v77 = vld [vmem:[#allocation2 + $0x58] sm:$0xff]
    %v78 = vld [vmem:[#allocation2 + $0x60] sm:$0xff]
    %v79 = vld [vmem:[#allocation2 + $0x68] sm:$0xff]
    %v80 = vld [vmem:[#allocation2 + $0x70] sm:$0xff]
    %v81 = vld [vmem:[#allocation2 + $0x78] sm:$0xff]
    %v82 = vld [vmem:[#allocation2 + $0x80] sm:$0xff]
    %v83 = vld [vmem:[#allocation2 + $0x88] sm:$0xff]
    %v84 = vld [vmem:[#allocation2 + $0x90] sm:$0xff]
    %v85 = vld [vmem:[#allocation2 + $0x98] sm:$0xff]
    %v86 = vld [vmem:[#allocation2 + $0xa0] sm:$0xff]
    %v87 = vld [vmem:[#allocation2 + $0xa8] sm:$0xff]
    %v88 = vld [vmem:[#allocation2 + $0xb0] sm:$0xff]
    %v89 = vld [vmem:[#allocation2 + $0xb8] sm:$0xff]
    %v90 = vld [vmem:[#allocation2 + $0xc0] sm:$0xff]
    %v91 = vld [vmem:[#allocation2 + $0xc8] sm:$0xff]
    %v92 = vld [vmem:[#allocation2 + $0xd0] sm:$0xff]
    %v93 = vld [vmem:[#allocation2 + $0xd8] sm:$0xff]
    %v94 = vld [vmem:[#allocation2 + $0xe0] sm:$0xff]
    %v95 = vld [vmem:[#allocation2 + $0xe8] sm:$0xff]
    %v96 = vld [vmem:[#allocation2 + $0xf0] sm:$0xff]
    %v97 = vld [vmem:[#allocation2 + $0xf8] sm:$0xff]
    %v98 = vld [vmem:[#allocation2 + $0x100] sm:$0xff]
    %v99 = vld [vmem:[#allocation2 + $0x108] sm:$0xff]
    %v100 = vld [vmem:[#allocation2 + $0x110] sm:$0xff]
    %v101 = vld [vmem:[#allocation2 + $0x118] sm:$0xff]
    %v102 = vld [vmem:[#allocation2 + $0x120] sm:$0xff]
    %v103 = vld [vmem:[#allocation2 + $0x128] sm:$0xff]
    %v104 = vld [vmem:[#allocation2 + $0x130] sm:$0xff]
    %v105 = vld [vmem:[#allocation2 + $0x138] sm:$0xff]
    %v106 = vld [vmem:[#allocation2 + $0x140] sm:$0xff]
    %v107 = vld [vmem:[#allocation2 + $0x148] sm:$0xff]
    %v108 = vld [vmem:[#allocation2 + $0x150] sm:$0xff]
    %v109 = vld [vmem:[#allocation2 + $0x158] sm:$0xff]
    %v110 = vld [vmem:[#allocation2 + $0x160] sm:$0xff]
    %v111 = vld [vmem:[#allocation2 + $0x168] sm:$0xff]
    %v112 = vld [vmem:[#allocation2 + $0x170] sm:$0xff]
    %v113 = vld [vmem:[#allocation2 + $0x178] sm:$0xff]
    %v114 = vld [vmem:[#allocation2 + $0x180] sm:$0xff]
    %v115 = vld [vmem:[#allocation2 + $0x188] sm:$0xff]
    %v116 = vld [vmem:[#allocation2 + $0x190] sm:$0xff]
    %v117 = vld [vmem:[#allocation2 + $0x198] sm:$0xff]
    %v118 = vld [vmem:[#allocation2 + $0x1a0] sm:$0xff]
    %v119 = vld [vmem:[#allocation2 + $0x1a8] sm:$0xff]
    %v120 = vld [vmem:[#allocation2 + $0x1b0] sm:$0xff]
    %v121 = vld [vmem:[#allocation2 + $0x1b8] sm:$0xff]
    %v122 = vld [vmem:[#allocation2 + $0x1c0] sm:$0xff]
    %v123 = vld [vmem:[#allocation2 + $0x1c8] sm:$0xff]
    %v124 = vld [vmem:[#allocation2 + $0x1d0] sm:$0xff]
    %v125 = vld [vmem:[#allocation2 + $0x1d8] sm:$0xff]
    %v126 = vld [vmem:[#allocation2 + $0x1e0] sm:$0xff]
    %v127 = vld [vmem:[#allocation2 + $0x1e8] sm:$0xff]
    %v128 = vld [vmem:[#allocation2 + $0x1f0] sm:$0x33]
    %v129 = vld [vmem:[%s2] sm:$0x3]
    %v131 = vperm.slane %v129, 0
    %v132 = vperm.slane %v129, 1
    %v198 = vunpack.c.l.b16 %v66
    %v199 = vunpack.c.h.b16 %v66
    %v200 = vunpack.c.l.b16 %v67
    %v201 = vunpack.c.h.b16 %v67
    %v202 = vunpack.c.l.b16 %v68
    %v203 = vunpack.c.h.b16 %v68
    %v204 = vunpack.c.l.b16 %v69
    %v205 = vunpack.c.h.b16 %v69
    %v206 = vunpack.c.l.b16 %v70
    %v207 = vunpack.c.h.b16 %v70
    %v208 = vunpack.c.l.b16 %v71
    %v209 = vunpack.c.h.b16 %v71
    %v210 = vunpack.c.l.b16 %v72
    %v211 = vunpack.c.h.b16 %v72
    %v212 = vunpack.c.l.b16 %v73
    %v213 = vunpack.c.h.b16 %v73
    %v214 = vunpack.c.l.b16 %v74
    %v215 = vunpack.c.h.b16 %v74
    %v216 = vunpack.c.l.b16 %v75
    %v217 = vunpack.c.h.b16 %v75
    %v218 = vunpack.c.l.b16 %v76
    %v219 = vunpack.c.h.b16 %v76
    %v220 = vunpack.c.l.b16 %v77
    %v221 = vunpack.c.h.b16 %v77
    %v222 = vunpack.c.l.b16 %v78
    %v223 = vunpack.c.h.b16 %v78
    %v224 = vunpack.c.l.b16 %v79
    %v225 = vunpack.c.h.b16 %v79
    %v226 = vunpack.c.l.b16 %v80
    %v227 = vunpack.c.h.b16 %v80
    %v228 = vunpack.c.l.b16 %v81
    %v229 = vunpack.c.h.b16 %v81
    %v230 = vunpack.c.l.b16 %v82
    %v231 = vunpack.c.h.b16 %v82
    %v232 = vunpack.c.l.b16 %v83
    %v233 = vunpack.c.h.b16 %v83
    %v234 = vunpack.c.l.b16 %v84
    %v235 = vunpack.c.h.b16 %v84
    %v236 = vunpack.c.l.b16 %v85
    %v237 = vunpack.c.h.b16 %v85
    %v238 = vunpack.c.l.b16 %v86
    %v239 = vunpack.c.h.b16 %v86
    %v240 = vunpack.c.l.b16 %v87
    %v241 = vunpack.c.h.b16 %v87
    %v242 = vunpack.c.l.b16 %v88
    %v243 = vunpack.c.h.b16 %v88
    %v244 = vunpack.c.l.b16 %v89
    %v245 = vunpack.c.h.b16 %v89
    %v246 = vunpack.c.l.b16 %v90
    %v247 = vunpack.c.h.b16 %v90
    %v248 = vunpack.c.l.b16 %v91
    %v249 = vunpack.c.h.b16 %v91
    %v250 = vunpack.c.l.b16 %v92
    %v251 = vunpack.c.h.b16 %v92
    %v252 = vunpack.c.l.b16 %v93
    %v253 = vunpack.c.h.b16 %v93
    %v254 = vunpack.c.l.b16 %v94
    %v255 = vunpack.c.h.b16 %v94
    %v256 = vunpack.c.l.b16 %v95
    %v257 = vunpack.c.h.b16 %v95
    %v258 = vunpack.c.l.b16 %v96
    %v259 = vunpack.c.h.b16 %v96
    %v260 = vunpack.c.l.b16 %v97
    %v261 = vunpack.c.h.b16 %v97
    %v262 = vunpack.c.l.b16 %v98
    %v263 = vunpack.c.h.b16 %v98
    %v264 = vunpack.c.l.b16 %v99
    %v265 = vunpack.c.h.b16 %v99
    %v266 = vunpack.c.l.b16 %v100
    %v267 = vunpack.c.h.b16 %v100
    %v268 = vunpack.c.l.b16 %v101
    %v269 = vunpack.c.h.b16 %v101
    %v270 = vunpack.c.l.b16 %v102
    %v271 = vunpack.c.h.b16 %v102
    %v272 = vunpack.c.l.b16 %v103
    %v273 = vunpack.c.h.b16 %v103
    %v274 = vunpack.c.l.b16 %v104
    %v275 = vunpack.c.h.b16 %v104
    %v276 = vunpack.c.l.b16 %v105
    %v277 = vunpack.c.h.b16 %v105
    %v278 = vunpack.c.l.b16 %v106
    %v279 = vunpack.c.h.b16 %v106
    %v280 = vunpack.c.l.b16 %v107
    %v281 = vunpack.c.h.b16 %v107
    %v282 = vunpack.c.l.b16 %v108
    %v283 = vunpack.c.h.b16 %v108
    %v284 = vunpack.c.l.b16 %v109
    %v285 = vunpack.c.h.b16 %v109
    %v286 = vunpack.c.l.b16 %v110
    %v287 = vunpack.c.h.b16 %v110
    %v288 = vunpack.c.l.b16 %v111
    %v289 = vunpack.c.h.b16 %v111
    %v290 = vunpack.c.l.b16 %v112
    %v291 = vunpack.c.h.b16 %v112
    %v292 = vunpack.c.l.b16 %v113
    %v293 = vunpack.c.h.b16 %v113
    %v294 = vunpack.c.l.b16 %v114
    %v295 = vunpack.c.h.b16 %v114
    %v296 = vunpack.c.l.b16 %v115
    %v297 = vunpack.c.h.b16 %v115
    %v298 = vunpack.c.l.b16 %v116
    %v299 = vunpack.c.h.b16 %v116
    %v300 = vunpack.c.l.b16 %v117
    %v301 = vunpack.c.h.b16 %v117
    %v302 = vunpack.c.l.b16 %v118
    %v303 = vunpack.c.h.b16 %v118
    %v304 = vunpack.c.l.b16 %v119
    %v305 = vunpack.c.h.b16 %v119
    %v306 = vunpack.c.l.b16 %v120
    %v307 = vunpack.c.h.b16 %v120
    %v308 = vunpack.c.l.b16 %v121
    %v309 = vunpack.c.h.b16 %v121
    %v310 = vunpack.c.l.b16 %v122
    %v311 = vunpack.c.h.b16 %v122
    %v312 = vunpack.c.l.b16 %v123
    %v313 = vunpack.c.h.b16 %v123
    %v314 = vunpack.c.l.b16 %v124
    %v315 = vunpack.c.h.b16 %v124
    %v316 = vunpack.c.l.b16 %v125
    %v317 = vunpack.c.h.b16 %v125
    %v318 = vunpack.c.l.b16 %v126
    %v319 = vunpack.c.h.b16 %v126
    %v320 = vunpack.c.l.b16 %v127
    %v321 = vunpack.c.h.b16 %v127
    %v322 = vunpack.c.l.b16 %v128
    %v323 = vunpack.c.h.b16 %v128
    %v324 = vpack.c.b16 %v200, %v198
    %v325 = vpack.c.b16 %v201, %v199
    %v326 = vpack.c.b16 %v204, %v202
    %v327 = vpack.c.b16 %v205, %v203
    %v328 = vpack.c.b16 %v208, %v206
    %v329 = vpack.c.b16 %v209, %v207
    %v330 = vpack.c.b16 %v212, %v210
    %v331 = vpack.c.b16 %v213, %v211
    %v332 = vpack.c.b16 %v216, %v214
    %v333 = vpack.c.b16 %v217, %v215
    %v334 = vpack.c.b16 %v220, %v218
    %v335 = vpack.c.b16 %v221, %v219
    %v336 = vpack.c.b16 %v224, %v222
    %v337 = vpack.c.b16 %v225, %v223
    %v338 = vpack.c.b16 %v228, %v226
    %v339 = vpack.c.b16 %v229, %v227
    %v340 = vpack.c.b16 %v232, %v230
    %v341 = vpack.c.b16 %v233, %v231
    %v342 = vpack.c.b16 %v236, %v234
    %v343 = vpack.c.b16 %v237, %v235
    %v344 = vpack.c.b16 %v240, %v238
    %v345 = vpack.c.b16 %v241, %v239
    %v346 = vpack.c.b16 %v244, %v242
    %v347 = vpack.c.b16 %v245, %v243
    %v348 = vpack.c.b16 %v248, %v246
    %v349 = vpack.c.b16 %v249, %v247
    %v350 = vpack.c.b16 %v252, %v250
    %v351 = vpack.c.b16 %v253, %v251
    %v352 = vpack.c.b16 %v256, %v254
    %v353 = vpack.c.b16 %v257, %v255
    %v354 = vpack.c.b16 %v260, %v258
    %v355 = vpack.c.b16 %v261, %v259
    %v356 = vpack.c.b16 %v264, %v262
    %v357 = vpack.c.b16 %v265, %v263
    %v358 = vpack.c.b16 %v268, %v266
    %v359 = vpack.c.b16 %v269, %v267
    %v360 = vpack.c.b16 %v272, %v270
    %v361 = vpack.c.b16 %v273, %v271
    %v362 = vpack.c.b16 %v276, %v274
    %v363 = vpack.c.b16 %v277, %v275
    %v364 = vpack.c.b16 %v280, %v278
    %v365 = vpack.c.b16 %v281, %v279
    %v366 = vpack.c.b16 %v284, %v282
    %v367 = vpack.c.b16 %v285, %v283
    %v368 = vpack.c.b16 %v288, %v286
    %v369 = vpack.c.b16 %v289, %v287
    %v370 = vpack.c.b16 %v292, %v290
    %v371 = vpack.c.b16 %v293, %v291
    %v372 = vpack.c.b16 %v296, %v294
    %v373 = vpack.c.b16 %v297, %v295
    %v374 = vpack.c.b16 %v300, %v298
    %v375 = vpack.c.b16 %v301, %v299
    %v376 = vpack.c.b16 %v304, %v302
    %v377 = vpack.c.b16 %v305, %v303
    %v378 = vpack.c.b16 %v308, %v306
    %v379 = vpack.c.b16 %v309, %v307
    %v380 = vpack.c.b16 %v312, %v310
    %v381 = vpack.c.b16 %v313, %v311
    %v382 = vpack.c.b16 %v316, %v314
    %v383 = vpack.c.b16 %v317, %v315
    %v384 = vpack.c.b16 %v320, %v318
    %v385 = vpack.c.b16 %v321, %v319
    %v386 = vpack.c.b16 %v322, %v322
    %v387 = vpack.c.b16 %v323, %v323
    %vm450 = vcmask 949248
    %v452 = vsel %vm450, %v65, 0
    %vm454 = vcmask 1041408
    %v456 = vsel %vm454, %v386, 0
    %v459 = vsel %vm454, %v387, 0
    %461 = vmatpush.bf16.msra.mxu0 %v338
    %462 = vmatpush.bf16.msra.mxu0 %v336
    %463 = vmatpush.bf16.msra.mxu0 %v334
    %464 = vmatpush.bf16.msra.mxu0 %v332
    %465 = vmatpush.bf16.msra.mxu0 %v330
    %466 = vmatpush.bf16.msra.mxu0 %v328
    %467 = vmatpush.bf16.msra.mxu0 %v326
    %468 = vmatpush.bf16.msra.mxu0 %v324
    %469 = vmatmul.bf16.gmra.mxu0 %v62
    %v470 = vpop.f32.mrf.mxu0
    %v471 = vadd.f32 %v131, %v470
    %v472 = vpop.f32.mrf.mxu0
    %473 = vdwg.mxu0
    %474 = vmatpush.bf16.msra.mxu0 %v354
    %475 = vmatpush.bf16.msra.mxu0 %v352
    %476 = vmatpush.bf16.msra.mxu0 %v350
    %477 = vmatpush.bf16.msra.mxu0 %v348
    %478 = vmatpush.bf16.msra.mxu0 %v346
    %479 = vmatpush.bf16.msra.mxu0 %v344
    %480 = vmatpush.bf16.msra.mxu0 %v342
    %481 = vmatpush.bf16.msra.mxu0 %v340
    %482 = vmatmul.bf16.gmra.mxu0 %v63
    %v483 = vpop.f32.mrf.mxu0
    %v484 = vadd.f32 %v471, %v483
    %v485 = vpop.f32.mrf.mxu0
    %486 = vdwg.mxu0
    %487 = vmatpush.bf16.msra.mxu0 %v370
    %488 = vmatpush.bf16.msra.mxu0 %v368
    %489 = vmatpush.bf16.msra.mxu0 %v366
    %490 = vmatpush.bf16.msra.mxu0 %v364
    %491 = vmatpush.bf16.msra.mxu0 %v362
    %492 = vmatpush.bf16.msra.mxu0 %v360
    %493 = vmatpush.bf16.msra.mxu0 %v358
    %494 = vmatpush.bf16.msra.mxu0 %v356
    %495 = vmatmul.bf16.gmra.mxu0 %v64
    %v496 = vpop.f32.mrf.mxu0
    %v497 = vadd.f32 %v484, %v496
    %v498 = vpop.f32.mrf.mxu0
    %499 = vdwg.mxu0
    %500 = vmatpush.bf16.msra.mxu0 %v456
    %501 = vmatpush.bf16.msra.mxu0 %v384
    %502 = vmatpush.bf16.msra.mxu0 %v382
    %503 = vmatpush.bf16.msra.mxu0 %v380
    %504 = vmatpush.bf16.msra.mxu0 %v378
    %505 = vmatpush.bf16.msra.mxu0 %v376
    %506 = vmatpush.bf16.msra.mxu0 %v374
    %507 = vmatpush.bf16.msra.mxu0 %v372
    %508 = vmatmul.bf16.gmra.mxu0 %v452
    %v509 = vpop.f32.mrf.mxu0
    %v510 = vadd.f32 %v497, %v509
    %v511 = vpop.f32.mrf.mxu0
    %512 = vdwg.mxu0
    %513 = vmatpush.bf16.msra.mxu0 %v339
    %514 = vmatpush.bf16.msra.mxu0 %v337
    %515 = vmatpush.bf16.msra.mxu0 %v335
    %516 = vmatpush.bf16.msra.mxu0 %v333
    %517 = vmatpush.bf16.msra.mxu0 %v331
    %518 = vmatpush.bf16.msra.mxu0 %v329
    %519 = vmatpush.bf16.msra.mxu0 %v327
    %520 = vmatpush.bf16.msra.mxu0 %v325
    %521 = vmatmul.bf16.gmra.mxu0 %v62
    %v522 = vpop.f32.mrf.mxu0
    %v523 = vadd.f32 %v132, %v522
    %v524 = vpop.f32.mrf.mxu0
    %525 = vdwg.mxu0
    %526 = vmatpush.bf16.msra.mxu0 %v355
    %527 = vmatpush.bf16.msra.mxu0 %v353
    %528 = vmatpush.bf16.msra.mxu0 %v351
    %529 = vmatpush.bf16.msra.mxu0 %v349
    %530 = vmatpush.bf16.msra.mxu0 %v347
    %531 = vmatpush.bf16.msra.mxu0 %v345
    %532 = vmatpush.bf16.msra.mxu0 %v343
    %533 = vmatpush.bf16.msra.mxu0 %v341
    %534 = vmatmul.bf16.gmra.mxu0 %v63
    %v535 = vpop.f32.mrf.mxu0
    %v536 = vadd.f32 %v523, %v535
    %v537 = vpop.f32.mrf.mxu0
    %538 = vdwg.mxu0
    %539 = vmatpush.bf16.msra.mxu0 %v371
    %540 = vmatpush.bf16.msra.mxu0 %v369
    %541 = vmatpush.bf16.msra.mxu0 %v367
    %542 = vmatpush.bf16.msra.mxu0 %v365
    %543 = vmatpush.bf16.msra.mxu0 %v363
    %544 = vmatpush.bf16.msra.mxu0 %v361
    %545 = vmatpush.bf16.msra.mxu0 %v359
    %546 = vmatpush.bf16.msra.mxu0 %v357
    %547 = vmatmul.bf16.gmra.mxu0 %v64
    %v548 = vpop.f32.mrf.mxu0
    %v549 = vadd.f32 %v536, %v548
    %v550 = vpop.f32.mrf.mxu0
    %551 = vdwg.mxu0
    %552 = vmatpush.bf16.msra.mxu0 %v459
    %553 = vmatpush.bf16.msra.mxu0 %v385
    %554 = vmatpush.bf16.msra.mxu0 %v383
    %555 = vmatpush.bf16.msra.mxu0 %v381
    %556 = vmatpush.bf16.msra.mxu0 %v379
    %557 = vmatpush.bf16.msra.mxu0 %v377
    %558 = vmatpush.bf16.msra.mxu0 %v375
    %559 = vmatpush.bf16.msra.mxu0 %v373
    %560 = vmatmul.bf16.gmra.mxu0 %v452
    %v561 = vpop.f32.mrf.mxu0
    %v562 = vadd.f32 %v549, %v561
    %v563 = vpop.f32.mrf.mxu0
    %564 = vdwg.mxu0
    %vm565 = vcmp.ge.f32.partialorder %v510, 0.0
    %vm566 = vcmp.ge.f32.partialorder %v562, 0.0
    %v567 = vmul.f32 %v510, 0.2
    %v568 = vmul.f32 %v562, 0.2
    %v569 = vsel %vm565, %v510, %v567
    %v570 = vsel %vm566, %v562, %v568
    %v571 = vpack.c.bf16 %v569, %v569
    %v572 = vpack.c.bf16 %v570, %v570
    %v573 = vld [vmem:[#allocation4] sm:$0xff]
    %v574 = vld [vmem:[#allocation4 + $0x8] sm:$0xff]
    %v575 = vld [vmem:[#allocation4 + $0x10] sm:$0xff]
    %v576 = vld [vmem:[#allocation4 + $0x18] sm:$0xff]
    %v577 = vld [vmem:[#allocation4 + $0x20] sm:$0xff]
    %v578 = vld [vmem:[#allocation4 + $0x28] sm:$0xff]
    %v579 = vld [vmem:[#allocation4 + $0x30] sm:$0xff]
    %v580 = vld [vmem:[#allocation4 + $0x38] sm:$0xff]
    %v581 = vld [vmem:[#allocation4 + $0x40] sm:$0xff]
    %v582 = vld [vmem:[#allocation4 + $0x48] sm:$0xff]
    %v583 = vld [vmem:[#allocation4 + $0x50] sm:$0xff]
    %v584 = vld [vmem:[#allocation4 + $0x58] sm:$0xff]
    %v585 = vld [vmem:[#allocation4 + $0x60] sm:$0xff]
    %v586 = vld [vmem:[#allocation4 + $0x68] sm:$0xff]
    %v587 = vld [vmem:[#allocation4 + $0x70] sm:$0xff]
    %v588 = vld [vmem:[#allocation4 + $0x78] sm:$0xff]
    %v589 = vld [vmem:[#allocation4 + $0x80] sm:$0xff]
    %v590 = vld [vmem:[#allocation4 + $0x88] sm:$0xff]
    %v591 = vld [vmem:[#allocation4 + $0x90] sm:$0xff]
    %v592 = vld [vmem:[#allocation4 + $0x98] sm:$0xff]
    %v593 = vld [vmem:[#allocation4 + $0xa0] sm:$0xff]
    %v594 = vld [vmem:[#allocation4 + $0xa8] sm:$0xff]
    %v595 = vld [vmem:[#allocation4 + $0xb0] sm:$0xff]
    %v596 = vld [vmem:[#allocation4 + $0xb8] sm:$0xff]
    %v597 = vld [vmem:[#allocation4 + $0xc0] sm:$0xff]
    %v598 = vld [vmem:[#allocation4 + $0xc8] sm:$0xff]
    %v599 = vld [vmem:[#allocation4 + $0xd0] sm:$0xff]
    %v600 = vld [vmem:[#allocation4 + $0xd8] sm:$0xff]
    %v601 = vld [vmem:[#allocation4 + $0xe0] sm:$0xff]
    %v602 = vld [vmem:[#allocation4 + $0xe8] sm:$0xff]
    %v603 = vld [vmem:[#allocation4 + $0xf0] sm:$0xff]
    %v604 = vld [vmem:[#allocation4 + $0xf8] sm:$0xff]
    %v605 = vld [vmem:[%s4] sm:$0x3]
    %v607 = vperm.slane %v605, 0
    %v608 = vperm.slane %v605, 1
    %v643 = vunpack.c.l.b16 %v573
    %v644 = vunpack.c.h.b16 %v573
    %v645 = vunpack.c.l.b16 %v574
    %v646 = vunpack.c.h.b16 %v574
    %v647 = vunpack.c.l.b16 %v575
    %v648 = vunpack.c.h.b16 %v575
    %v649 = vunpack.c.l.b16 %v576
    %v650 = vunpack.c.h.b16 %v576
    %v651 = vunpack.c.l.b16 %v577
    %v652 = vunpack.c.h.b16 %v577
    %v653 = vunpack.c.l.b16 %v578
    %v654 = vunpack.c.h.b16 %v578
    %v655 = vunpack.c.l.b16 %v579
    %v656 = vunpack.c.h.b16 %v579
    %v657 = vunpack.c.l.b16 %v580
    %v658 = vunpack.c.h.b16 %v580
    %v659 = vunpack.c.l.b16 %v581
    %v660 = vunpack.c.h.b16 %v581
    %v661 = vunpack.c.l.b16 %v582
    %v662 = vunpack.c.h.b16 %v582
    %v663 = vunpack.c.l.b16 %v583
    %v664 = vunpack.c.h.b16 %v583
    %v665 = vunpack.c.l.b16 %v584
    %v666 = vunpack.c.h.b16 %v584
    %v667 = vunpack.c.l.b16 %v585
    %v668 = vunpack.c.h.b16 %v585
    %v669 = vunpack.c.l.b16 %v586
    %v670 = vunpack.c.h.b16 %v586
    %v671 = vunpack.c.l.b16 %v587
    %v672 = vunpack.c.h.b16 %v587
    %v673 = vunpack.c.l.b16 %v588
    %v674 = vunpack.c.h.b16 %v588
    %v675 = vunpack.c.l.b16 %v589
    %v676 = vunpack.c.h.b16 %v589
    %v677 = vunpack.c.l.b16 %v590
    %v678 = vunpack.c.h.b16 %v590
    %v679 = vunpack.c.l.b16 %v591
    %v680 = vunpack.c.h.b16 %v591
    %v681 = vunpack.c.l.b16 %v592
    %v682 = vunpack.c.h.b16 %v592
    %v683 = vunpack.c.l.b16 %v593
    %v684 = vunpack.c.h.b16 %v593
    %v685 = vunpack.c.l.b16 %v594
    %v686 = vunpack.c.h.b16 %v594
    %v687 = vunpack.c.l.b16 %v595
    %v688 = vunpack.c.h.b16 %v595
    %v689 = vunpack.c.l.b16 %v596
    %v690 = vunpack.c.h.b16 %v596
    %v691 = vunpack.c.l.b16 %v597
    %v692 = vunpack.c.h.b16 %v597
    %v693 = vunpack.c.l.b16 %v598
    %v694 = vunpack.c.h.b16 %v598
    %v695 = vunpack.c.l.b16 %v599
    %v696 = vunpack.c.h.b16 %v599
    %v697 = vunpack.c.l.b16 %v600
    %v698 = vunpack.c.h.b16 %v600
    %v699 = vunpack.c.l.b16 %v601
    %v700 = vunpack.c.h.b16 %v601
    %v701 = vunpack.c.l.b16 %v602
    %v702 = vunpack.c.h.b16 %v602
    %v703 = vunpack.c.l.b16 %v603
    %v704 = vunpack.c.h.b16 %v603
    %v705 = vunpack.c.l.b16 %v604
    %v706 = vunpack.c.h.b16 %v604
    %v707 = vpack.c.b16 %v645, %v643
    %v708 = vpack.c.b16 %v646, %v644
    %v709 = vpack.c.b16 %v649, %v647
    %v710 = vpack.c.b16 %v650, %v648
    %v711 = vpack.c.b16 %v653, %v651
    %v712 = vpack.c.b16 %v654, %v652
    %v713 = vpack.c.b16 %v657, %v655
    %v714 = vpack.c.b16 %v658, %v656
    %v715 = vpack.c.b16 %v661, %v659
    %v716 = vpack.c.b16 %v662, %v660
    %v717 = vpack.c.b16 %v665, %v663
    %v718 = vpack.c.b16 %v666, %v664
    %v719 = vpack.c.b16 %v669, %v667
    %v720 = vpack.c.b16 %v670, %v668
    %v721 = vpack.c.b16 %v673, %v671
    %v722 = vpack.c.b16 %v674, %v672
    %v723 = vpack.c.b16 %v677, %v675
    %v724 = vpack.c.b16 %v678, %v676
    %v725 = vpack.c.b16 %v681, %v679
    %v726 = vpack.c.b16 %v682, %v680
    %v727 = vpack.c.b16 %v685, %v683
    %v728 = vpack.c.b16 %v686, %v684
    %v729 = vpack.c.b16 %v689, %v687
    %v730 = vpack.c.b16 %v690, %v688
    %v731 = vpack.c.b16 %v693, %v691
    %v732 = vpack.c.b16 %v694, %v692
    %v733 = vpack.c.b16 %v697, %v695
    %v734 = vpack.c.b16 %v698, %v696
    %v735 = vpack.c.b16 %v701, %v699
    %v736 = vpack.c.b16 %v702, %v700
    %v737 = vpack.c.b16 %v705, %v703
    %v738 = vpack.c.b16 %v706, %v704
    %771 = vmatpush.bf16.msra.mxu0 %v721
    %772 = vmatpush.bf16.msra.mxu0 %v719
    %773 = vmatpush.bf16.msra.mxu0 %v717
    %774 = vmatpush.bf16.msra.mxu0 %v715
    %775 = vmatpush.bf16.msra.mxu0 %v713
    %776 = vmatpush.bf16.msra.mxu0 %v711
    %777 = vmatpush.bf16.msra.mxu0 %v709
    %778 = vmatpush.bf16.msra.mxu0 %v707
    %779 = vmatmul.bf16.gmra.mxu0 %v571
    %v780 = vpop.f32.mrf.mxu0
    %v781 = vadd.f32 %v607, %v780
    %v782 = vpop.f32.mrf.mxu0
    %783 = vdwg.mxu0
    %784 = vmatpush.bf16.msra.mxu0 %v737
    %785 = vmatpush.bf16.msra.mxu0 %v735
    %786 = vmatpush.bf16.msra.mxu0 %v733
    %787 = vmatpush.bf16.msra.mxu0 %v731
    %788 = vmatpush.bf16.msra.mxu0 %v729
    %789 = vmatpush.bf16.msra.mxu0 %v727
    %790 = vmatpush.bf16.msra.mxu0 %v725
    %791 = vmatpush.bf16.msra.mxu0 %v723
    %792 = vmatmul.bf16.gmra.mxu0 %v572
    %v793 = vpop.f32.mrf.mxu0
    %v794 = vadd.f32 %v781, %v793
    %v795 = vpop.f32.mrf.mxu0
    %796 = vdwg.mxu0
    %797 = vmatpush.bf16.msra.mxu0 %v722
    %798 = vmatpush.bf16.msra.mxu0 %v720
    %799 = vmatpush.bf16.msra.mxu0 %v718
    %800 = vmatpush.bf16.msra.mxu0 %v716
    %801 = vmatpush.bf16.msra.mxu0 %v714
    %802 = vmatpush.bf16.msra.mxu0 %v712
    %803 = vmatpush.bf16.msra.mxu0 %v710
    %804 = vmatpush.bf16.msra.mxu0 %v708
    %805 = vmatmul.bf16.gmra.mxu0 %v571
    %v806 = vpop.f32.mrf.mxu0
    %v807 = vadd.f32 %v608, %v806
    %v808 = vpop.f32.mrf.mxu0
    %809 = vdwg.mxu0
    %810 = vmatpush.bf16.msra.mxu0 %v738
    %811 = vmatpush.bf16.msra.mxu0 %v736
    %812 = vmatpush.bf16.msra.mxu0 %v734
    %813 = vmatpush.bf16.msra.mxu0 %v732
    %814 = vmatpush.bf16.msra.mxu0 %v730
    %815 = vmatpush.bf16.msra.mxu0 %v728
    %816 = vmatpush.bf16.msra.mxu0 %v726
    %817 = vmatpush.bf16.msra.mxu0 %v724
    %818 = vmatmul.bf16.gmra.mxu0 %v572
    %v819 = vpop.f32.mrf.mxu0
    %v820 = vadd.f32 %v807, %v819
    %v821 = vpop.f32.mrf.mxu0
    %822 = vdwg.mxu0
    %vm823 = vcmp.ge.f32.partialorder %v794, 0.0
    %vm824 = vcmp.ge.f32.partialorder %v820, 0.0
    %v825 = vmul.f32 %v794, 0.2
    %v826 = vmul.f32 %v820, 0.2
    %v827 = vsel %vm823, %v794, %v825
    %v828 = vsel %vm824, %v820, %v826
    %v829 = vpack.c.bf16 %v827, %v827
    %v830 = vpack.c.bf16 %v828, %v828
    %v831 = vld [vmem:[%s5] sm:$0xf]
    %v832 = vld [vmem:[%s5 + $0x4] sm:$0xf]
    %v833 = vld [vmem:[%s5 + $0x8] sm:$0xf]
    %v834 = vld [vmem:[%s5 + $0xc] sm:$0xf]
    %v835 = vld [vmem:[%s5 + $0x10] sm:$0xf]
    %v836 = vld [vmem:[%s5 + $0x14] sm:$0xf]
    %v837 = vld [vmem:[%s5 + $0x18] sm:$0xf]
    %v838 = vld [vmem:[%s5 + $0x1c] sm:$0xf]
    %v839 = vld [vmem:[%s5 + $0x20] sm:$0xf]
    %v840 = vld [vmem:[%s5 + $0x24] sm:$0xf]
    %v841 = vld [vmem:[%s5 + $0x28] sm:$0xf]
    %v842 = vld [vmem:[%s5 + $0x2c] sm:$0xf]
    %v843 = vld [vmem:[%s5 + $0x30] sm:$0xf]
    %v844 = vld [vmem:[%s5 + $0x34] sm:$0xf]
    %v845 = vld [vmem:[%s5 + $0x38] sm:$0xf]
    %v846 = vld [vmem:[%s5 + $0x3c] sm:$0xf]
    %v847 = vld [vmem:[%s5 + $0x40] sm:$0xf]
    %v848 = vld [vmem:[%s5 + $0x44] sm:$0xf]
    %v849 = vld [vmem:[%s5 + $0x48] sm:$0xf]
    %v850 = vld [vmem:[%s5 + $0x4c] sm:$0xf]
    %v851 = vld [vmem:[%s5 + $0x50] sm:$0xf]
    %v852 = vld [vmem:[%s5 + $0x54] sm:$0xf]
    %v853 = vld [vmem:[%s5 + $0x58] sm:$0xf]
    %v854 = vld [vmem:[%s5 + $0x5c] sm:$0xf]
    %v855 = vld [vmem:[%s5 + $0x60] sm:$0xf]
    %v856 = vld [vmem:[%s5 + $0x64] sm:$0xf]
    %v857 = vld [vmem:[%s5 + $0x68] sm:$0xf]
    %v858 = vld [vmem:[%s5 + $0x6c] sm:$0xf]
    %v859 = vld [vmem:[%s5 + $0x70] sm:$0xf]
    %v860 = vld [vmem:[%s5 + $0x74] sm:$0xf]
    %v861 = vld [vmem:[%s5 + $0x78] sm:$0xf]
    %v862 = vld [vmem:[%s5 + $0x7c] sm:$0xf]
    %v863 = vld [vmem:[%s6] sm:$0x1]
    %v865 = vperm.slane %v863, 0
    %v899 = vunpack.c.l.b16 %v831
    %v900 = vunpack.c.l.b16 %v832
    %v901 = vunpack.c.l.b16 %v833
    %v902 = vunpack.c.l.b16 %v834
    %v903 = vunpack.c.l.b16 %v835
    %v904 = vunpack.c.l.b16 %v836
    %v905 = vunpack.c.l.b16 %v837
    %v906 = vunpack.c.l.b16 %v838
    %v907 = vunpack.c.l.b16 %v839
    %v908 = vunpack.c.l.b16 %v840
    %v909 = vunpack.c.l.b16 %v841
    %v910 = vunpack.c.l.b16 %v842
    %v911 = vunpack.c.l.b16 %v843
    %v912 = vunpack.c.l.b16 %v844
    %v913 = vunpack.c.l.b16 %v845
    %v914 = vunpack.c.l.b16 %v846
    %v915 = vunpack.c.l.b16 %v847
    %v916 = vunpack.c.l.b16 %v848
    %v917 = vunpack.c.l.b16 %v849
    %v918 = vunpack.c.l.b16 %v850
    %v919 = vunpack.c.l.b16 %v851
    %v920 = vunpack.c.l.b16 %v852
    %v921 = vunpack.c.l.b16 %v853
    %v922 = vunpack.c.l.b16 %v854
    %v923 = vunpack.c.l.b16 %v855
    %v924 = vunpack.c.l.b16 %v856
    %v925 = vunpack.c.l.b16 %v857
    %v926 = vunpack.c.l.b16 %v858
    %v927 = vunpack.c.l.b16 %v859
    %v928 = vunpack.c.l.b16 %v860
    %v929 = vunpack.c.l.b16 %v861
    %v930 = vunpack.c.l.b16 %v862
    %v931 = vpack.c.b16 %v900, %v899
    %v932 = vpack.c.b16 %v902, %v901
    %v933 = vpack.c.b16 %v904, %v903
    %v934 = vpack.c.b16 %v906, %v905
    %v935 = vpack.c.b16 %v908, %v907
    %v936 = vpack.c.b16 %v910, %v909
    %v937 = vpack.c.b16 %v912, %v911
    %v938 = vpack.c.b16 %v914, %v913
    %v939 = vpack.c.b16 %v916, %v915
    %v940 = vpack.c.b16 %v918, %v917
    %v941 = vpack.c.b16 %v920, %v919
    %v942 = vpack.c.b16 %v922, %v921
    %v943 = vpack.c.b16 %v924, %v923
    %v944 = vpack.c.b16 %v926, %v925
    %v945 = vpack.c.b16 %v928, %v927
    %v946 = vpack.c.b16 %v930, %v929
    %963 = vmatpush.bf16.msra.mxu0 %v938
    %964 = vmatpush.bf16.msra.mxu0 %v937
    %965 = vmatpush.bf16.msra.mxu0 %v936
    %966 = vmatpush.bf16.msra.mxu0 %v935
    %967 = vmatpush.bf16.msra.mxu0 %v934
    %968 = vmatpush.bf16.msra.mxu0 %v933
    %969 = vmatpush.bf16.msra.mxu0 %v932
    %970 = vmatpush.bf16.msra.mxu0 %v931
    %971 = vmatmul.bf16.gmra.mxu0 %v829
    %v972 = vpop.f32.mrf.mxu0
    %v973 = vadd.f32 %v865, %v972
    %v974 = vpop.f32.mrf.mxu0
    %975 = vdwg.mxu0
    %976 = vmatpush.bf16.msra.mxu0 %v946
    %977 = vmatpush.bf16.msra.mxu0 %v945
    %978 = vmatpush.bf16.msra.mxu0 %v944
    %979 = vmatpush.bf16.msra.mxu0 %v943
    %980 = vmatpush.bf16.msra.mxu0 %v942
    %981 = vmatpush.bf16.msra.mxu0 %v941
    %982 = vmatpush.bf16.msra.mxu0 %v940
    %983 = vmatpush.bf16.msra.mxu0 %v939
    %984 = vmatmul.bf16.gmra.mxu0 %v830
    %v985 = vpop.f32.mrf.mxu0
    %v986 = vadd.f32 %v973, %v985
    %v987 = vpop.f32.mrf.mxu0
    %988 = vdwg.mxu0
    %vm989 = vcmask 15360
    %990 = vst.msk [vmem:[%s7] sm:$0xff] %vm989, %v986
    // Predicated region
    $region38: #{tpu_custom_call.1} parent=1 // pred_check
      _
    $region39: #{tpu_custom_call.1} parent=1 // pred_check_branch
      %992 = sbr.rel (0) target = $region41
    $region40: #{tpu_custom_call.1} parent=1 // pred_region
      _
    $region41: #{tpu_custom_call.1} parent=1 // pred_fallthru
      _
    // Predicated region
    $region42: #{tpu_custom_call.1} parent=1 // pred_check
      _
    $region43: #{tpu_custom_call.1} parent=1 // pred_check_branch
      %994 = sbr.rel (0) target = $region45
    $region44: #{tpu_custom_call.1} parent=1 // pred_region
      _
    $region45: #{tpu_custom_call.1} parent=1 // pred_fallthru
      _
    %995 = vsyncpa [#allocation3], 1
    %996 = vsyncpa [#allocation5], 1

</llo_original>
